<compile_context>
chip_gen: v7x
topology: tpu7x:2x2x1
jax: 0.10.0
libtpu: 0.0.40
codegen_flags: <defaults>
</compile_context>

<pallas_src>
import jax
import jax.numpy as jnp
from jax.experimental import pallas as pl
from jax.experimental.pallas import tpu as pltpu


def _round_up(n, m):
    return ((n + m - 1) // m) * m


def _default_tanh_dtype():
    """bf16 tanh on chips with a bf16 EUP (v6e/v7x); f32 elsewhere (v5e etc.)."""
    try:
        kind = jax.devices()[0].device_kind.lower()
    except Exception:
        return jnp.float32
    if ("v6" in kind) or ("v7" in kind) or ("7x" in kind):
        return jnp.bfloat16
    return jnp.float32


def _pick_tiling(B, cap):
    """Pick (tb, B_pad): batch tile and padded batch size.

    * tb is a multiple of 8 (f32 sublane tile).
    * >= 2 grid steps whenever the batch allows it (keeps both v7x TCs busy).
    * Prefer a tb that divides the (8-rounded) batch so no big pad copy is
      needed; otherwise pad the batch up to a multiple of the capped tile.
    """
    B8 = _round_up(B, 8)
    limit = min(cap, B8)
    if B8 >= 16:                      # leave room for >= 2 grid steps
        limit = min(limit, max(8, (B8 // 2) // 8 * 8))
    limit = max(8, limit - limit % 8)
    best = 8
    for t in range(limit, 7, -8):
        if B8 % t == 0:
            best = t
            break
    if best >= max(64, limit // 4):
        return best, B8
    return limit, _round_up(B8, limit)


def _make_kernel(n_sub, tanh_dtype):
    bf16 = jnp.bfloat16

    def kernel(x_ref,
               w1_ref, b1_ref,
               w2_ref, b2_ref,
               wed_ref, bed_ref,      # fused W3 @ A @ W4 and its bias
               w5_ref, b5_ref,
               w6_ref, b6_ref,        # lane-padded output layer
               o_ref):
        w1, b1 = w1_ref[...], b1_ref[...]
        w2, b2 = w2_ref[...], b2_ref[...]
        wed, bed = wed_ref[...], bed_ref[...]
        w5, b5 = w5_ref[...], b5_ref[...]
        w6, b6 = w6_ref[...], b6_ref[...]

        def lin_tanh(h_bf, w, b):
            acc = jnp.dot(h_bf, w, preferred_element_type=jnp.float32) + b
            return jnp.tanh(acc.astype(tanh_dtype)).astype(bf16)

        tb = x_ref.shape[0]
        sub = tb // n_sub
        # n_sub independent row-chains in one basic block: the LLO scheduler
        # can overlap one chain's MXU matmul with another chain's EUP tanh.
        for s in range(n_sub):
            rows = pl.ds(s * sub, sub)
            h = lin_tanh(x_ref[rows, :].astype(bf16), w1, b1)   # enc layer 1
            h = lin_tanh(h, w2, b2)                             # enc layer 2
            h = lin_tanh(h, wed, bed)                           # enc3 @ A @ dec1
            h = lin_tanh(h, w5, b5)                             # dec layer 2
            out = jnp.dot(h, w6, preferred_element_type=jnp.float32) + b6
            o_ref[rows, :] = out.astype(o_ref.dtype)

    return kernel


def fuse_params(params, output_dim):
    """Fold W3@A@W4, pad the output layer to 128 lanes, cast weights to bf16.

    Returns (fused_param_tuple, padded_output_dim); biases stay f32 (1, out).
    Exact algebraic fold (done in f32):
      tanh((h2 W3 + b3) A W4 + b4) == tanh(h2 (W3 A W4) + (b3 A W4 + b4)).
    """
    (w1, b1, w2, b2, w3, b3, a, w4, b4, w5, b5, w6, b6) = params
    w_ed = (w3 @ a) @ w4
    b_ed = (b3 @ a) @ w4 + b4
    hidden = w6.shape[0]
    n_pad = _round_up(output_dim, 128)
    w6p = jnp.zeros((hidden, n_pad), jnp.float32).at[:, :output_dim].set(w6)
    b6p = jnp.zeros((1, n_pad), jnp.float32).at[:, :output_dim].set(b6)
    bf = lambda t: t.astype(jnp.bfloat16)
    fused = (bf(w1), b1, bf(w2), b2, bf(w_ed), b_ed, bf(w5), b5, bf(w6p), b6p)
    return fused, n_pad


def _lls_pallas(x, fused, output_dim, n_pad, tb_cap, tanh_dtype):
    B, input_dim = x.shape
    tb, B_pad = _pick_tiling(B, tb_cap)
    if B_pad != B:
        # TODO(synk): a masked last tile (@pl.when on row validity) would avoid
        # this extra HBM pass for ragged batches.
        x = jnp.zeros((B_pad, input_dim), x.dtype).at[:B].set(x)

    # Split the tile into independent sub-chains (each <= 256 rows, mult of 8).
    if tb % 16 != 0:
        n_sub = 1
    else:
        n_sub = 2
        while tb // n_sub > 256 and (tb // (n_sub * 2)) % 8 == 0:
            n_sub *= 2

    kernel = _make_kernel(n_sub, tanh_dtype)

    def full_spec(shape):
        return pl.BlockSpec(shape, lambda i: tuple(0 for _ in shape))

    in_specs = [pl.BlockSpec((tb, input_dim), lambda i: (i, 0))]
    in_specs += [full_spec(p.shape) for p in fused]

    hidden = fused[0].shape[1]
    flops = 2 * B_pad * (input_dim * hidden + 3 * hidden * hidden
                         + hidden * n_pad)
    transcendentals = 4 * B_pad * hidden
    bytes_accessed = (int(x.size) * x.dtype.itemsize
                      + sum(int(p.size) * p.dtype.itemsize for p in fused)
                      + B_pad * n_pad * 4)

    out = pl.pallas_call(
        kernel,
        out_shape=jax.ShapeDtypeStruct((B_pad, n_pad), jnp.float32),
        grid_spec=pltpu.PrefetchScalarGridSpec(
            num_scalar_prefetch=0,
            grid=(B_pad // tb,),
            in_specs=in_specs,
            out_specs=pl.BlockSpec((tb, n_pad), lambda i: (i, 0)),
        ),
        compiler_params=pltpu.CompilerParams(
            dimension_semantics=("parallel",),
            vmem_limit_bytes=32 * 1024 * 1024,
        ),
        cost_estimate=pl.CostEstimate(
            flops=flops,
            transcendentals=transcendentals,
            bytes_accessed=bytes_accessed),
    )(x, *fused)
    # TODO(synk): callers that can consume the 128-lane-padded buffer directly
    # should skip this slice (it is one extra copy of the output).
    return out[:B, :output_dim]


def make_lls_forward(params, *, tb_cap=1024, tanh_dtype=None):
    """Fuse / pad / cast parameters ONCE; return a jitted forward(x)."""
    output_dim = params[11].shape[1]                 # w6: (hidden, output_dim)
    fused, n_pad = fuse_params(params, output_dim)
    if tanh_dtype is None:
        tanh_dtype = _default_tanh_dtype()

    @jax.jit
    def _fwd(x, *fused_args):
        return _lls_pallas(x, fused_args, output_dim, n_pad, tb_cap, tanh_dtype)

    def forward(x):
        return _fwd(x, *fused)

    return forward


def init_params(key, lifting_dim, input_dim, output_dim, hidden=128):
    """Deterministic synthetic init mirroring the PyTorch module's shapes.

    nn.Linear(in, out) -> weight stored pre-transposed as (in, out), bias (1, out).
    matrix_A.weight ~ Normal(0, 1/lifting_dim); stored transposed so z @ a == z @ A.T.
    """
    ks = jax.random.split(key, 13)

    def linear(kw, kb, fan_in, fan_out):
        bound = 1.0 / jnp.sqrt(fan_in)
        w = jax.random.uniform(kw, (fan_in, fan_out), jnp.float32, -bound, bound)
        b = jax.random.uniform(kb, (1, fan_out), jnp.float32, -bound, bound)
        return w, b

    w1, b1 = linear(ks[0], ks[1], input_dim, hidden)
    w2, b2 = linear(ks[2], ks[3], hidden, hidden)
    w3, b3 = linear(ks[4], ks[5], hidden, lifting_dim)
    a_weight = jax.random.normal(ks[6], (lifting_dim, lifting_dim),
                                 jnp.float32) * (1.0 / lifting_dim)
    a = a_weight.T
    w4, b4 = linear(ks[7], ks[8], lifting_dim, hidden)
    w5, b5 = linear(ks[9], ks[10], hidden, hidden)
    w6, b6 = linear(ks[11], ks[12], hidden, output_dim)
    return (w1, b1, w2, b2, w3, b3, a, w4, b4, w5, b5, w6, b6)


def lls_reference(x, params):
    """Pure-f32 unfused reference matching the PyTorch forward."""
    (w1, b1, w2, b2, w3, b3, a, w4, b4, w5, b5, w6, b6) = params
    h = jnp.tanh(x @ w1 + b1)
    h = jnp.tanh(h @ w2 + b2)
    z = (h @ w3 + b3) @ a
    h = jnp.tanh(z @ w4 + b4)
    h = jnp.tanh(h @ w5 + b5)
    return h @ w6 + b6


def lls_fused_reference(x, fused, output_dim, tanh_dtype):
    """Mirrors the kernel math (bf16 matmul operands, f32 accumulation)."""
    (w1, b1, w2, b2, wed, bed, w5, b5, w6p, b6p) = fused
    f32 = jnp.float32
    bf16 = jnp.bfloat16

    def lin_tanh(h_bf, w, b):
        acc = h_bf.astype(f32) @ w.astype(f32) + b
        return jnp.tanh(acc.astype(tanh_dtype)).astype(bf16)

    h = lin_tanh(x.astype(bf16), w1, b1)
    h = lin_tanh(h, w2, b2)
    h = lin_tanh(h, wed, bed)
    h = lin_tanh(h, w5, b5)
    out = h.astype(f32) @ w6p.astype(f32) + b6p
    return out[:, :output_dim]


if __name__ == "__main__":
    lifting_dim, input_dim, output_dim = 16, 32, 32
    batch = 16

    key = jax.random.PRNGKey(0)
    kx, kp = jax.random.split(key)
    x = jax.random.normal(kx, (batch, input_dim), jnp.float32)
    params = init_params(kp, lifting_dim, input_dim, output_dim)

    tanh_dtype = _default_tanh_dtype()
    forward = make_lls_forward(params, tanh_dtype=tanh_dtype)

    # batch=16 -> tb=8, 2 grid steps (exercises pipelining / megacore path).
    out = jax.block_until_ready(forward(x))
    assert out.shape == (batch, output_dim)

    # Tight check vs a reference mirroring the kernel's bf16-operand math.
    fused, _ = fuse_params(params, output_dim)
    ref_fused = lls_fused_reference(x, fused, output_dim, tanh_dtype)
    assert jnp.allclose(out, ref_fused, atol=2e-3, rtol=2e-3), (
        float(jnp.max(jnp.abs(out - ref_fused))))

    # Loose check vs the pure-f32 PyTorch-equivalent forward (bf16 rounding only).
    ref_f32 = lls_reference(x, params)
    assert jnp.allclose(out, ref_f32, atol=5e-2, rtol=5e-2), (
        float(jnp.max(jnp.abs(out - ref_f32))))

    print("KERNEL_OK")
</pallas_src>

<mosaic_0001>
module attributes {stable_mosaic.version = 11 : i64} {
  func.func @kernel(%arg0: i32, %arg1: memref<8x32xf32, #tpu.memory_space<vmem>>, %arg2: memref<32x128xbf16, #tpu.memory_space<vmem>>, %arg3: memref<1x128xf32, #tpu.memory_space<vmem>>, %arg4: memref<128x128xbf16, #tpu.memory_space<vmem>>, %arg5: memref<1x128xf32, #tpu.memory_space<vmem>>, %arg6: memref<128x128xbf16, #tpu.memory_space<vmem>>, %arg7: memref<1x128xf32, #tpu.memory_space<vmem>>, %arg8: memref<128x128xbf16, #tpu.memory_space<vmem>>, %arg9: memref<1x128xf32, #tpu.memory_space<vmem>>, %arg10: memref<128x128xbf16, #tpu.memory_space<vmem>>, %arg11: memref<1x128xf32, #tpu.memory_space<vmem>>, %arg12: memref<8x128xf32, #tpu.memory_space<vmem>>) attributes {dimension_semantics = [#tpu.dimension_semantics<parallel>], iteration_bounds = array<i64: 2>, scalar_prefetch = 0 : i64, scratch_operands = 0 : i64, tpu.core_type = #tpu.core_type<tc>, window_params = [{transform_indices = @transform_0, window_bounds = array<i64: 8, 32>}, {pipeline_mode = #tpu.pipeline_mode<synchronous>, transform_indices = @transform_1, window_bounds = array<i64: 32, 128>}, {pipeline_mode = #tpu.pipeline_mode<synchronous>, transform_indices = @transform_2, window_bounds = array<i64: 1, 128>}, {pipeline_mode = #tpu.pipeline_mode<synchronous>, transform_indices = @transform_3, window_bounds = array<i64: 128, 128>}, {pipeline_mode = #tpu.pipeline_mode<synchronous>, transform_indices = @transform_4, window_bounds = array<i64: 1, 128>}, {pipeline_mode = #tpu.pipeline_mode<synchronous>, transform_indices = @transform_5, window_bounds = array<i64: 128, 128>}, {pipeline_mode = #tpu.pipeline_mode<synchronous>, transform_indices = @transform_6, window_bounds = array<i64: 1, 128>}, {pipeline_mode = #tpu.pipeline_mode<synchronous>, transform_indices = @transform_7, window_bounds = array<i64: 128, 128>}, {pipeline_mode = #tpu.pipeline_mode<synchronous>, transform_indices = @transform_8, window_bounds = array<i64: 1, 128>}, {pipeline_mode = #tpu.pipeline_mode<synchronous>, transform_indices = @transform_9, window_bounds = array<i64: 128, 128>}, {pipeline_mode = #tpu.pipeline_mode<synchronous>, transform_indices = @transform_10, window_bounds = array<i64: 1, 128>}, {transform_indices = @transform_11, window_bounds = array<i64: 8, 128>}]} {
    %c0 = arith.constant 0 : index
    %c0_0 = arith.constant 0 : index
    %0 = vector.load %arg2[%c0, %c0_0] : memref<32x128xbf16, #tpu.memory_space<vmem>>, vector<32x128xbf16>
    %c0_1 = arith.constant 0 : index
    %c0_2 = arith.constant 0 : index
    %1 = vector.load %arg3[%c0_1, %c0_2] : memref<1x128xf32, #tpu.memory_space<vmem>>, vector<1x128xf32>
    %c0_3 = arith.constant 0 : index
    %c0_4 = arith.constant 0 : index
    %2 = vector.load %arg4[%c0_3, %c0_4] : memref<128x128xbf16, #tpu.memory_space<vmem>>, vector<128x128xbf16>
    %c0_5 = arith.constant 0 : index
    %c0_6 = arith.constant 0 : index
    %3 = vector.load %arg5[%c0_5, %c0_6] : memref<1x128xf32, #tpu.memory_space<vmem>>, vector<1x128xf32>
    %c0_7 = arith.constant 0 : index
    %c0_8 = arith.constant 0 : index
    %4 = vector.load %arg6[%c0_7, %c0_8] : memref<128x128xbf16, #tpu.memory_space<vmem>>, vector<128x128xbf16>
    %c0_9 = arith.constant 0 : index
    %c0_10 = arith.constant 0 : index
    %5 = vector.load %arg7[%c0_9, %c0_10] : memref<1x128xf32, #tpu.memory_space<vmem>>, vector<1x128xf32>
    %c0_11 = arith.constant 0 : index
    %c0_12 = arith.constant 0 : index
    %6 = vector.load %arg8[%c0_11, %c0_12] : memref<128x128xbf16, #tpu.memory_space<vmem>>, vector<128x128xbf16>
    %c0_13 = arith.constant 0 : index
    %c0_14 = arith.constant 0 : index
    %7 = vector.load %arg9[%c0_13, %c0_14] : memref<1x128xf32, #tpu.memory_space<vmem>>, vector<1x128xf32>
    %c0_15 = arith.constant 0 : index
    %c0_16 = arith.constant 0 : index
    %8 = vector.load %arg10[%c0_15, %c0_16] : memref<128x128xbf16, #tpu.memory_space<vmem>>, vector<128x128xbf16>
    %c0_17 = arith.constant 0 : index
    %c0_18 = arith.constant 0 : index
    %9 = vector.load %arg11[%c0_17, %c0_18] : memref<1x128xf32, #tpu.memory_space<vmem>>, vector<1x128xf32>
    %c0_19 = arith.constant 0 : index
    %c0_20 = arith.constant 0 : index
    %10 = vector.load %arg1[%c0_19, %c0_20] : memref<8x32xf32, #tpu.memory_space<vmem>>, vector<8x32xf32>
    %11 = arith.truncf %10 : vector<8x32xf32> to vector<8x32xbf16>
    %cst = arith.constant dense<0.000000e+00> : vector<8x128xf32>
    %12 = tpu.matmul %11, %0, %cst {dimension_numbers = #tpu.dot_dimension_numbers<[1], [0], [0], [1], [0, 0, 1, 1], [], []>} : vector<8x32xbf16>, vector<32x128xbf16>, vector<8x128xf32> -> vector<8x128xf32>
    %13 = vector.broadcast %1 : vector<1x128xf32> to vector<8x128xf32>
    %14 = arith.addf %12, %13 : vector<8x128xf32>
    %15 = math.tanh %14 : vector<8x128xf32>
    %16 = arith.truncf %15 : vector<8x128xf32> to vector<8x128xbf16>
    %cst_21 = arith.constant dense<0.000000e+00> : vector<8x128xf32>
    %17 = tpu.matmul %16, %2, %cst_21 {dimension_numbers = #tpu.dot_dimension_numbers<[1], [0], [0], [1], [0, 0, 1, 1], [], []>} : vector<8x128xbf16>, vector<128x128xbf16>, vector<8x128xf32> -> vector<8x128xf32>
    %18 = vector.broadcast %3 : vector<1x128xf32> to vector<8x128xf32>
    %19 = arith.addf %17, %18 : vector<8x128xf32>
    %20 = math.tanh %19 : vector<8x128xf32>
    %21 = arith.truncf %20 : vector<8x128xf32> to vector<8x128xbf16>
    %cst_22 = arith.constant dense<0.000000e+00> : vector<8x128xf32>
    %22 = tpu.matmul %21, %4, %cst_22 {dimension_numbers = #tpu.dot_dimension_numbers<[1], [0], [0], [1], [0, 0, 1, 1], [], []>} : vector<8x128xbf16>, vector<128x128xbf16>, vector<8x128xf32> -> vector<8x128xf32>
    %23 = vector.broadcast %5 : vector<1x128xf32> to vector<8x128xf32>
    %24 = arith.addf %22, %23 : vector<8x128xf32>
    %25 = math.tanh %24 : vector<8x128xf32>
    %26 = arith.truncf %25 : vector<8x128xf32> to vector<8x128xbf16>
    %cst_23 = arith.constant dense<0.000000e+00> : vector<8x128xf32>
    %27 = tpu.matmul %26, %6, %cst_23 {dimension_numbers = #tpu.dot_dimension_numbers<[1], [0], [0], [1], [0, 0, 1, 1], [], []>} : vector<8x128xbf16>, vector<128x128xbf16>, vector<8x128xf32> -> vector<8x128xf32>
    %28 = vector.broadcast %7 : vector<1x128xf32> to vector<8x128xf32>
    %29 = arith.addf %27, %28 : vector<8x128xf32>
    %30 = math.tanh %29 : vector<8x128xf32>
    %31 = arith.truncf %30 : vector<8x128xf32> to vector<8x128xbf16>
    %cst_24 = arith.constant dense<0.000000e+00> : vector<8x128xf32>
    %32 = tpu.matmul %31, %8, %cst_24 {dimension_numbers = #tpu.dot_dimension_numbers<[1], [0], [0], [1], [0, 0, 1, 1], [], []>} : vector<8x128xbf16>, vector<128x128xbf16>, vector<8x128xf32> -> vector<8x128xf32>
    %33 = vector.broadcast %9 : vector<1x128xf32> to vector<8x128xf32>
    %34 = arith.addf %32, %33 : vector<8x128xf32>
    %c0_25 = arith.constant 0 : index
    %c0_26 = arith.constant 0 : index
    %35 = vector.load %arg12[%c0_25, %c0_26] : memref<8x128xf32, #tpu.memory_space<vmem>>, vector<8x128xf32>
    tpu.vector_store %arg12[%c0_25, %c0_26], %34 {strides = array<i32>} : memref<8x128xf32, #tpu.memory_space<vmem>>, vector<8x128xf32>,
    return
  }
  func.func @transform_0(%arg0: i32) -> (i32, i32) {
    %c0_i32 = arith.constant 0 : i32
    %c0_i32_0 = arith.constant 0 : i32
    return %arg0, %c0_i32 : i32, i32
  }
  func.func @transform_1(%arg0: i32) -> (i32, i32) {
    %c0_i32 = arith.constant 0 : i32
    %c0_i32_0 = arith.constant 0 : i32
    %c0_i32_1 = arith.constant 0 : i32
    return %c0_i32, %c0_i32_0 : i32, i32
  }
  func.func @transform_2(%arg0: i32) -> (i32, i32) {
    %c0_i32 = arith.constant 0 : i32
    %c0_i32_0 = arith.constant 0 : i32
    %c0_i32_1 = arith.constant 0 : i32
    return %c0_i32, %c0_i32_0 : i32, i32
  }
  func.func @transform_3(%arg0: i32) -> (i32, i32) {
    %c0_i32 = arith.constant 0 : i32
    %c0_i32_0 = arith.constant 0 : i32
    %c0_i32_1 = arith.constant 0 : i32
    return %c0_i32, %c0_i32_0 : i32, i32
  }
  func.func @transform_4(%arg0: i32) -> (i32, i32) {
    %c0_i32 = arith.constant 0 : i32
    %c0_i32_0 = arith.constant 0 : i32
    %c0_i32_1 = arith.constant 0 : i32
    return %c0_i32, %c0_i32_0 : i32, i32
  }
  func.func @transform_5(%arg0: i32) -> (i32, i32) {
    %c0_i32 = arith.constant 0 : i32
    %c0_i32_0 = arith.constant 0 : i32
    %c0_i32_1 = arith.constant 0 : i32
    return %c0_i32, %c0_i32_0 : i32, i32
  }
  func.func @transform_6(%arg0: i32) -> (i32, i32) {
    %c0_i32 = arith.constant 0 : i32
    %c0_i32_0 = arith.constant 0 : i32
    %c0_i32_1 = arith.constant 0 : i32
    return %c0_i32, %c0_i32_0 : i32, i32
  }
  func.func @transform_7(%arg0: i32) -> (i32, i32) {
    %c0_i32 = arith.constant 0 : i32
    %c0_i32_0 = arith.constant 0 : i32
    %c0_i32_1 = arith.constant 0 : i32
    return %c0_i32, %c0_i32_0 : i32, i32
  }
  func.func @transform_8(%arg0: i32) -> (i32, i32) {
    %c0_i32 = arith.constant 0 : i32
    %c0_i32_0 = arith.constant 0 : i32
    %c0_i32_1 = arith.constant 0 : i32
    return %c0_i32, %c0_i32_0 : i32, i32
  }
  func.func @transform_9(%arg0: i32) -> (i32, i32) {
    %c0_i32 = arith.constant 0 : i32
    %c0_i32_0 = arith.constant 0 : i32
    %c0_i32_1 = arith.constant 0 : i32
    return %c0_i32, %c0_i32_0 : i32, i32
  }
  func.func @transform_10(%arg0: i32) -> (i32, i32) {
    %c0_i32 = arith.constant 0 : i32
    %c0_i32_0 = arith.constant 0 : i32
    %c0_i32_1 = arith.constant 0 : i32
    return %c0_i32, %c0_i32_0 : i32, i32
  }
  func.func @transform_11(%arg0: i32) -> (i32, i32) {
    %c0_i32 = arith.constant 0 : i32
    %c0_i32_0 = arith.constant 0 : i32
    return %arg0, %c0_i32 : i32, i32
  }
}

</mosaic_0001>

<llo_original>
// kernel: _fwd.1
$region0: #{_fwd.1}
  #allocation0 [shape = 'u32[]', space=smem, size = 0x4, offset = 0x4, fixed_abs, tag = 'smem constant byte address 0x4 - core index']
  #allocation1 [shape = 'u32[144,128]{1,0:T(1,128)}', space=vmem, size = 0x12000, scoped, tag = 'internal scratch']
  %s0 = inlined_call_operand.hbm [shape: f32[16,32], index: 0, kind: input, shape index: {}]
  %s1 = inlined_call_operand.hbm [shape: bf16[32,128], index: 1, kind: input, shape index: {}]
  %s2 = inlined_call_operand.vmem [shape: f32[1,128], index: 2, kind: input, shape index: {}]
  %s3 = inlined_call_operand.hbm [shape: bf16[128,128], index: 3, kind: input, shape index: {}]
  %s4 = inlined_call_operand.vmem [shape: f32[1,128], index: 4, kind: input, shape index: {}]
  %s5 = inlined_call_operand.hbm [shape: bf16[128,128], index: 5, kind: input, shape index: {}]
  %s6 = inlined_call_operand.vmem [shape: f32[1,128], index: 6, kind: input, shape index: {}]
  %s7 = inlined_call_operand.hbm [shape: bf16[128,128], index: 7, kind: input, shape index: {}]
  %s8 = inlined_call_operand.vmem [shape: f32[1,128], index: 8, kind: input, shape index: {}]
  %s9 = inlined_call_operand.hbm [shape: bf16[128,128], index: 9, kind: input, shape index: {}]
  %s10 = inlined_call_operand.vmem [shape: f32[1,128], index: 10, kind: input, shape index: {}]
  %s11 = inlined_call_operand.hbm [shape: f32[16,128], index: 11, kind: output, shape index: {}]
  %s12 = sld [smem:[#allocation0]]
  $region101: #{_fwd.1} parent=0
    _
  %s14 = ssub.s32 1, %s12
  %s15 = scalar_select 0, %s14, %s12
  $region1: #{_fwd.1} parent=0
    #allocation2 [shape = 'u8[8192]{0}', space=vmem, size = 0x2000, scoped, tag = 'input window, operand 0']
    #allocation3 [shape = 's32[2]{0}', space=sflag, size = 0x8, scoped, tag = 'scoped memory for _fwd.1']
    #allocation4 [shape = 's32[2]{0}', space=sflag, size = 0x8, scoped, tag = 'scoped memory for _fwd.1']
    #allocation5 [shape = 'u8[8192]{0}', space=vmem, size = 0x2000, scoped, tag = 'input window, operand 1, single buffered']
    #allocation6 [shape = 's32[1]{0}', space=sflag, size = 0x4, scoped, tag = 'scoped memory for _fwd.1']
    #allocation7 [shape = 'u8[32768]{0}', space=vmem, size = 0x8000, scoped, tag = 'input window, operand 3, single buffered']
    #allocation8 [shape = 'u8[32768]{0}', space=vmem, size = 0x8000, scoped, tag = 'input window, operand 5, single buffered']
    #allocation9 [shape = 's32[1]{0}', space=sflag, size = 0x4, scoped, tag = 'scoped memory for _fwd.1']
    #allocation10 [shape = 'u8[32768]{0}', space=vmem, size = 0x8000, scoped, tag = 'input window, operand 7, single buffered']
    #allocation11 [shape = 'u8[32768]{0}', space=vmem, size = 0x8000, scoped, tag = 'input window, operand 9, single buffered']
    #allocation12 [shape = 's32[1]{0}', space=sflag, size = 0x4, scoped, tag = 'scoped memory for _fwd.1']
    #allocation13 [shape = 'u8[8192]{0}', space=vmem, size = 0x2000, scoped, tag = 'output window, operand 0']
    %16 = vsyncpa [#allocation3], 0
    %s17 = scalar_lea.sflag [#allocation3], 1
    %18 = vsyncpa %s17, 0
    %19 = vsyncpa [#allocation6], 0
    %20 = vsyncpa [#allocation9], 0
    %21 = vsyncpa [#allocation12], 0
    %22 = vsyncpa [#allocation4], 0
    %s23 = scalar_lea.sflag [#allocation4], 1
    %24 = vsyncpa %s23, 0
    loop: start=0, step=1, limit=4
    $region2: #{_fwd.1} parent=1 // loop_pre_header
      _
    $region3: #{_fwd.1} parent=1 // loop_header
      %s26 = sphi 0, %s30
      %p27 = scmp.ge.s32.totalorder %s26, 4
      %s36 = sphi 0, %s38
      %s39 = sphi 0, %s36
      %s40 = sphi 0, %s39
      %s56 = sphi 0, %s40
      %s60 = sphi 0, %s60
      %s62 = sphi 0, %s60
      %s63 = sphi 0, %s62
      %s77 = sphi 0, %s63
      %s81 = sphi 0, %s81
      %s83 = sphi 0, %s81
      %s84 = sphi 0, %s83
      %s98 = sphi 0, %s84
      %s102 = sphi 0, %s102
      %s104 = sphi 0, %s102
      %s105 = sphi 0, %s104
      %s119 = sphi 0, %s105
      %s123 = sphi 0, %s123
      %s125 = sphi 0, %s123
      %s126 = sphi 0, %s125
      %s140 = sphi 0, %s126
      %s144 = sphi 0, %s144
      %s146 = sphi 0, %s144
      %s147 = sphi 0, %s146
      %s161 = sphi 0, %s147
      %s165 = sphi 0, %s165
      %s167 = sphi 0, %s165
      %s168 = sphi 0, %s167
      %s182 = sphi 0, %s168
      %s186 = sphi 0, %s186
      %s188 = sphi 0, %s186
      %s189 = sphi 0, %s188
      %s203 = sphi 0, %s189
      %s207 = sphi 0, %s207
      %s209 = sphi 0, %s207
      %s210 = sphi 0, %s209
      %s224 = sphi 0, %s210
      %s228 = sphi 0, %s228
      %s230 = sphi 0, %s228
      %s231 = sphi 0, %s230
      %s245 = sphi 0, %s231
      %s249 = sphi 0, %s249
      %s251 = sphi 0, %s249
      %s252 = sphi 0, %s251
      %s266 = sphi 0, %s252
      %s272 = sphi 0, %s274
      %s275 = sphi 0, %s272
      %s276 = sphi 0, %s275
      %s292 = sphi 0, %s276
    $region4: #{_fwd.1} parent=1 // loop_header_branch
      %29 = sbr.rel (%p27) target = $region8
    $region5: #{_fwd.1} parent=1 // loop_body
      %s31 = ssub.s32 %s26, 1
      %s32 = ssub.s32 %s26, 2
      %s33 = sadd.s32 %s26, 1
      %s34 = ssub.s32 %s26, %s33
      %p35 = scmp.eq.s32.totalorder %s34, 0
      %s37 = sadd.s32 %s36, 1
      %s38 = scalar_select %p35, %s36, %s37
      %p41 = pneg %p35
      %p42 = scmp.eq.s32.totalorder %s26, 1
      %p43 = por %p41, %p42
      %p44 = scmp.ne.s32.totalorder %s36, %s39
      %p45 = scmp.eq.s32.totalorder %s26, 0
      %p46 = por %p44, %p45
      %p47 = scmp.ne.s32.totalorder %s36, %s39
      %p48 = scmp.eq.s32.totalorder %s31, 1
      %p49 = por %p47, %p48
      %p50 = scmp.ne.s32.totalorder %s39, %s40
      %p51 = scmp.eq.s32.totalorder %s31, 0
      %p52 = por %p50, %p51
      %p53 = scmp.ne.s32.totalorder %s39, %s40
      %p54 = scmp.eq.s32.totalorder %s32, 1
      %p55 = por %p53, %p54
      %p57 = scmp.ne.s32.totalorder %s40, %s56
      %p58 = scmp.eq.s32.totalorder %s32, 0
      %p59 = por %p57, %p58
      %s61 = sadd.s32 %s60, 1
      %p64 = scmp.eq.s32.totalorder %s26, 1
      %p65 = scmp.ne.s32.totalorder %s60, %s62
      %p66 = scmp.eq.s32.totalorder %s26, 0
      %p67 = por %p65, %p66
      %p68 = scmp.ne.s32.totalorder %s60, %s62
      %p69 = scmp.eq.s32.totalorder %s31, 1
      %p70 = por %p68, %p69
      %p71 = scmp.ne.s32.totalorder %s62, %s63
      %p72 = scmp.eq.s32.totalorder %s31, 0
      %p73 = por %p71, %p72
      %p74 = scmp.ne.s32.totalorder %s62, %s63
      %p75 = scmp.eq.s32.totalorder %s32, 1
      %p76 = por %p74, %p75
      %p78 = scmp.ne.s32.totalorder %s63, %s77
      %p79 = scmp.eq.s32.totalorder %s32, 0
      %p80 = por %p78, %p79
      %s82 = sadd.s32 %s81, 1
      %p85 = scmp.eq.s32.totalorder %s26, 1
      %p86 = scmp.ne.s32.totalorder %s81, %s83
      %p87 = scmp.eq.s32.totalorder %s26, 0
      %p88 = por %p86, %p87
      %p89 = scmp.ne.s32.totalorder %s81, %s83
      %p90 = scmp.eq.s32.totalorder %s31, 1
      %p91 = por %p89, %p90
      %p92 = scmp.ne.s32.totalorder %s83, %s84
      %p93 = scmp.eq.s32.totalorder %s31, 0
      %p94 = por %p92, %p93
      %p95 = scmp.ne.s32.totalorder %s83, %s84
      %p96 = scmp.eq.s32.totalorder %s32, 1
      %p97 = por %p95, %p96
      %p99 = scmp.ne.s32.totalorder %s84, %s98
      %p100 = scmp.eq.s32.totalorder %s32, 0
      %p101 = por %p99, %p100
      %s103 = sadd.s32 %s102, 1
      %p106 = scmp.eq.s32.totalorder %s26, 1
      %p107 = scmp.ne.s32.totalorder %s102, %s104
      %p108 = scmp.eq.s32.totalorder %s26, 0
      %p109 = por %p107, %p108
      %p110 = scmp.ne.s32.totalorder %s102, %s104
      %p111 = scmp.eq.s32.totalorder %s31, 1
      %p112 = por %p110, %p111
      %p113 = scmp.ne.s32.totalorder %s104, %s105
      %p114 = scmp.eq.s32.totalorder %s31, 0
      %p115 = por %p113, %p114
      %p116 = scmp.ne.s32.totalorder %s104, %s105
      %p117 = scmp.eq.s32.totalorder %s32, 1
      %p118 = por %p116, %p117
      %p120 = scmp.ne.s32.totalorder %s105, %s119
      %p121 = scmp.eq.s32.totalorder %s32, 0
      %p122 = por %p120, %p121
      %s124 = sadd.s32 %s123, 1
      %p127 = scmp.eq.s32.totalorder %s26, 1
      %p128 = scmp.ne.s32.totalorder %s123, %s125
      %p129 = scmp.eq.s32.totalorder %s26, 0
      %p130 = por %p128, %p129
      %p131 = scmp.ne.s32.totalorder %s123, %s125
      %p132 = scmp.eq.s32.totalorder %s31, 1
      %p133 = por %p131, %p132
      %p134 = scmp.ne.s32.totalorder %s125, %s126
      %p135 = scmp.eq.s32.totalorder %s31, 0
      %p136 = por %p134, %p135
      %p137 = scmp.ne.s32.totalorder %s125, %s126
      %p138 = scmp.eq.s32.totalorder %s32, 1
      %p139 = por %p137, %p138
      %p141 = scmp.ne.s32.totalorder %s126, %s140
      %p142 = scmp.eq.s32.totalorder %s32, 0
      %p143 = por %p141, %p142
      %s145 = sadd.s32 %s144, 1
      %p148 = scmp.eq.s32.totalorder %s26, 1
      %p149 = scmp.ne.s32.totalorder %s144, %s146
      %p150 = scmp.eq.s32.totalorder %s26, 0
      %p151 = por %p149, %p150
      %p152 = scmp.ne.s32.totalorder %s144, %s146
      %p153 = scmp.eq.s32.totalorder %s31, 1
      %p154 = por %p152, %p153
      %p155 = scmp.ne.s32.totalorder %s146, %s147
      %p156 = scmp.eq.s32.totalorder %s31, 0
      %p157 = por %p155, %p156
      %p158 = scmp.ne.s32.totalorder %s146, %s147
      %p159 = scmp.eq.s32.totalorder %s32, 1
      %p160 = por %p158, %p159
      %p162 = scmp.ne.s32.totalorder %s147, %s161
      %p163 = scmp.eq.s32.totalorder %s32, 0
      %p164 = por %p162, %p163
      %s166 = sadd.s32 %s165, 1
      %p169 = scmp.eq.s32.totalorder %s26, 1
      %p170 = scmp.ne.s32.totalorder %s165, %s167
      %p171 = scmp.eq.s32.totalorder %s26, 0
      %p172 = por %p170, %p171
      %p173 = scmp.ne.s32.totalorder %s165, %s167
      %p174 = scmp.eq.s32.totalorder %s31, 1
      %p175 = por %p173, %p174
      %p176 = scmp.ne.s32.totalorder %s167, %s168
      %p177 = scmp.eq.s32.totalorder %s31, 0
      %p178 = por %p176, %p177
      %p179 = scmp.ne.s32.totalorder %s167, %s168
      %p180 = scmp.eq.s32.totalorder %s32, 1
      %p181 = por %p179, %p180
      %p183 = scmp.ne.s32.totalorder %s168, %s182
      %p184 = scmp.eq.s32.totalorder %s32, 0
      %p185 = por %p183, %p184
      %s187 = sadd.s32 %s186, 1
      %p190 = scmp.eq.s32.totalorder %s26, 1
      %p191 = scmp.ne.s32.totalorder %s186, %s188
      %p192 = scmp.eq.s32.totalorder %s26, 0
      %p193 = por %p191, %p192
      %p194 = scmp.ne.s32.totalorder %s186, %s188
      %p195 = scmp.eq.s32.totalorder %s31, 1
      %p196 = por %p194, %p195
      %p197 = scmp.ne.s32.totalorder %s188, %s189
      %p198 = scmp.eq.s32.totalorder %s31, 0
      %p199 = por %p197, %p198
      %p200 = scmp.ne.s32.totalorder %s188, %s189
      %p201 = scmp.eq.s32.totalorder %s32, 1
      %p202 = por %p200, %p201
      %p204 = scmp.ne.s32.totalorder %s189, %s203
      %p205 = scmp.eq.s32.totalorder %s32, 0
      %p206 = por %p204, %p205
      %s208 = sadd.s32 %s207, 1
      %p211 = scmp.eq.s32.totalorder %s26, 1
      %p212 = scmp.ne.s32.totalorder %s207, %s209
      %p213 = scmp.eq.s32.totalorder %s26, 0
      %p214 = por %p212, %p213
      %p215 = scmp.ne.s32.totalorder %s207, %s209
      %p216 = scmp.eq.s32.totalorder %s31, 1
      %p217 = por %p215, %p216
      %p218 = scmp.ne.s32.totalorder %s209, %s210
      %p219 = scmp.eq.s32.totalorder %s31, 0
      %p220 = por %p218, %p219
      %p221 = scmp.ne.s32.totalorder %s209, %s210
      %p222 = scmp.eq.s32.totalorder %s32, 1
      %p223 = por %p221, %p222
      %p225 = scmp.ne.s32.totalorder %s210, %s224
      %p226 = scmp.eq.s32.totalorder %s32, 0
      %p227 = por %p225, %p226
      %s229 = sadd.s32 %s228, 1
      %p232 = scmp.eq.s32.totalorder %s26, 1
      %p233 = scmp.ne.s32.totalorder %s228, %s230
      %p234 = scmp.eq.s32.totalorder %s26, 0
      %p235 = por %p233, %p234
      %p236 = scmp.ne.s32.totalorder %s228, %s230
      %p237 = scmp.eq.s32.totalorder %s31, 1
      %p238 = por %p236, %p237
      %p239 = scmp.ne.s32.totalorder %s230, %s231
      %p240 = scmp.eq.s32.totalorder %s31, 0
      %p241 = por %p239, %p240
      %p242 = scmp.ne.s32.totalorder %s230, %s231
      %p243 = scmp.eq.s32.totalorder %s32, 1
      %p244 = por %p242, %p243
      %p246 = scmp.ne.s32.totalorder %s231, %s245
      %p247 = scmp.eq.s32.totalorder %s32, 0
      %p248 = por %p246, %p247
      %s250 = sadd.s32 %s249, 1
      %p253 = scmp.eq.s32.totalorder %s26, 1
      %p254 = scmp.ne.s32.totalorder %s249, %s251
      %p255 = scmp.eq.s32.totalorder %s26, 0
      %p256 = por %p254, %p255
      %p257 = scmp.ne.s32.totalorder %s249, %s251
      %p258 = scmp.eq.s32.totalorder %s31, 1
      %p259 = por %p257, %p258
      %p260 = scmp.ne.s32.totalorder %s251, %s252
      %p261 = scmp.eq.s32.totalorder %s31, 0
      %p262 = por %p260, %p261
      %p263 = scmp.ne.s32.totalorder %s251, %s252
      %p264 = scmp.eq.s32.totalorder %s32, 1
      %p265 = por %p263, %p264
      %p267 = scmp.ne.s32.totalorder %s252, %s266
      %p268 = scmp.eq.s32.totalorder %s32, 0
      %p269 = por %p267, %p268
      %s270 = ssub.s32 %s26, %s33
      %p271 = scmp.eq.s32.totalorder %s270, 0
      %s273 = sadd.s32 %s272, 1
      %s274 = scalar_select %p271, %s272, %s273
      %p277 = pneg %p271
      %p278 = scmp.eq.s32.totalorder %s26, 1
      %p279 = por %p277, %p278
      %p280 = scmp.ne.s32.totalorder %s272, %s275
      %p281 = scmp.eq.s32.totalorder %s26, 0
      %p282 = por %p280, %p281
      %p283 = scmp.ne.s32.totalorder %s272, %s275
      %p284 = scmp.eq.s32.totalorder %s31, 1
      %p285 = por %p283, %p284
      %p286 = scmp.ne.s32.totalorder %s275, %s276
      %p287 = scmp.eq.s32.totalorder %s31, 0
      %p288 = por %p286, %p287
      %p289 = scmp.ne.s32.totalorder %s275, %s276
      %p290 = scmp.eq.s32.totalorder %s32, 1
      %p291 = por %p289, %p290
      %p293 = scmp.ne.s32.totalorder %s276, %s292
      %p294 = scmp.eq.s32.totalorder %s32, 0
      %p295 = por %p293, %p294
      %p296 = scmp.le.s32.totalorder 1, %s26
      %p297 = scmp.lt.s32.totalorder %s26, 3
      %p298 = pnand %p296, %p297
      %p299 = pneg %p298
      // Predicated region
      $region9: #{_fwd.1} parent=5 // pred_check
        _
      $region10: #{_fwd.1} parent=5 // pred_check_branch
        %301 = sbr.rel (%p298) target = $region12
      $region11: #{_fwd.1} parent=5 // pred_region
        %s302 = ssub.s32 %s26, 1
        // Predicated region
        $region13: #{_fwd.1} parent=11 // pred_check
          %p303 = pneg %p73
        $region14: #{_fwd.1} parent=11 // pred_check_branch
          %305 = sbr.rel (%p303) target = $region16
        $region15: #{_fwd.1} parent=11 // pred_region
          %s307 = ssub.s32 256, 256
          %308 = vsyncadd [#allocation6], %s307
          %s309 = sshll.u32 [#allocation5], 4
          %s310 = int_to_ptr.vmem [resolvable:$true] %s309
          %315 = dma.hbm_to_vmem [thread:$0]  %s1, 256, %s310, [#allocation6], 64, 64, 4
        $region16: #{_fwd.1} parent=11 // pred_fallthru
          _
        // Predicated region
        $region17: #{_fwd.1} parent=11 // pred_check
          %p316 = pneg %p94
        $region18: #{_fwd.1} parent=11 // pred_check_branch
          %318 = sbr.rel (%p316) target = $region20
        $region19: #{_fwd.1} parent=11 // pred_region
          _
        $region20: #{_fwd.1} parent=11 // pred_fallthru
          _
        // Predicated region
        $region21: #{_fwd.1} parent=11 // pred_check
          %p319 = pneg %p115
        $region22: #{_fwd.1} parent=11 // pred_check_branch
          %321 = sbr.rel (%p319) target = $region24
        $region23: #{_fwd.1} parent=11 // pred_region
          %s323 = ssub.s32 1024, 1024
          %324 = vsyncadd [#allocation6], %s323
          %s325 = sshll.u32 [#allocation7], 4
          %s326 = int_to_ptr.vmem [resolvable:$true] %s325
          %331 = dma.hbm_to_vmem [thread:$0]  %s3, 1024, %s326, [#allocation6], 64, 64, 4
        $region24: #{_fwd.1} parent=11 // pred_fallthru
          _
        // Predicated region
        $region25: #{_fwd.1} parent=11 // pred_check
          %p332 = pneg %p136
        $region26: #{_fwd.1} parent=11 // pred_check_branch
          %334 = sbr.rel (%p332) target = $region28
        $region27: #{_fwd.1} parent=11 // pred_region
          _
        $region28: #{_fwd.1} parent=11 // pred_fallthru
          _
        // Predicated region
        $region29: #{_fwd.1} parent=11 // pred_check
          %p335 = pneg %p157
        $region30: #{_fwd.1} parent=11 // pred_check_branch
          %337 = sbr.rel (%p335) target = $region32
        $region31: #{_fwd.1} parent=11 // pred_region
          %s339 = ssub.s32 1024, 1024
          %340 = vsyncadd [#allocation9], %s339
          %s341 = sshll.u32 [#allocation8], 4
          %s342 = int_to_ptr.vmem [resolvable:$true] %s341
          %347 = dma.hbm_to_vmem [thread:$0]  %s5, 1024, %s342, [#allocation9], 64, 64, 4
        $region32: #{_fwd.1} parent=11 // pred_fallthru
          _
        // Predicated region
        $region33: #{_fwd.1} parent=11 // pred_check
          %p348 = pneg %p178
        $region34: #{_fwd.1} parent=11 // pred_check_branch
          %350 = sbr.rel (%p348) target = $region36
        $region35: #{_fwd.1} parent=11 // pred_region
          _
        $region36: #{_fwd.1} parent=11 // pred_fallthru
          _
        // Predicated region
        $region37: #{_fwd.1} parent=11 // pred_check
          %p351 = pneg %p199
        $region38: #{_fwd.1} parent=11 // pred_check_branch
          %353 = sbr.rel (%p351) target = $region40
        $region39: #{_fwd.1} parent=11 // pred_region
          %s355 = ssub.s32 1024, 1024
          %356 = vsyncadd [#allocation9], %s355
          %s357 = sshll.u32 [#allocation10], 4
          %s358 = int_to_ptr.vmem [resolvable:$true] %s357
          %363 = dma.hbm_to_vmem [thread:$0]  %s7, 1024, %s358, [#allocation9], 64, 64, 4
        $region40: #{_fwd.1} parent=11 // pred_fallthru
          _
        // Predicated region
        $region41: #{_fwd.1} parent=11 // pred_check
          %p364 = pneg %p220
        $region42: #{_fwd.1} parent=11 // pred_check_branch
          %366 = sbr.rel (%p364) target = $region44
        $region43: #{_fwd.1} parent=11 // pred_region
          _
        $region44: #{_fwd.1} parent=11 // pred_fallthru
          _
        // Predicated region
        $region45: #{_fwd.1} parent=11 // pred_check
          %p367 = pneg %p241
        $region46: #{_fwd.1} parent=11 // pred_check_branch
          %369 = sbr.rel (%p367) target = $region48
        $region47: #{_fwd.1} parent=11 // pred_region
          %s371 = ssub.s32 1024, 1024
          %372 = vsyncadd [#allocation12], %s371
          %s373 = sshll.u32 [#allocation11], 4
          %s374 = int_to_ptr.vmem [resolvable:$true] %s373
          %379 = dma.hbm_to_vmem [thread:$0]  %s9, 1024, %s374, [#allocation12], 64, 64, 4
        $region48: #{_fwd.1} parent=11 // pred_fallthru
          _
        // Predicated region
        $region49: #{_fwd.1} parent=11 // pred_check
          %p380 = pneg %p262
        $region50: #{_fwd.1} parent=11 // pred_check_branch
          %382 = sbr.rel (%p380) target = $region52
        $region51: #{_fwd.1} parent=11 // pred_region
          _
        $region52: #{_fwd.1} parent=11 // pred_fallthru
          _
      $region12: #{_fwd.1} parent=5 // pred_fallthru
        _
      %p383 = scmp.lt.s32.totalorder %s26, 2
      // Predicated region
      $region53: #{_fwd.1} parent=5 // pred_check
        %p384 = pneg %p383
      $region54: #{_fwd.1} parent=5 // pred_check_branch
        %386 = sbr.rel (%p384) target = $region56
      $region55: #{_fwd.1} parent=5 // pred_region
        // Predicated region
        $region57: #{_fwd.1} parent=55 // pred_check
          %p387 = pneg %p46
        $region58: #{_fwd.1} parent=55 // pred_check_branch
          %389 = sbr.rel (%p387) target = $region60
        $region59: #{_fwd.1} parent=55 // pred_region
          %s390 = sand.u32 %s36, 1
          %s391 = scalar_lea.sflag [#allocation3], %s390
          %s392 = sand.u32 %s36, 1
          %s393 = smul.addr %s392, 8
          %s394 = scalar_lea.vmem [#allocation2], %s393
          %s396 = ssub.s32 128, 128
          %397 = vsyncadd %s391, %s396
          %s398 = smul.addr %s26, 128
          %s399 = scalar_lea.hbm %s0, %s398
          %s401 = sshll.u32 %s394, 4
          %s402 = int_to_ptr.vmem [resolvable:$true] %s401
          %404 = dma.hbm_to_vmem [thread:$0]  %s399, 128, %s402, %s391
        $region60: #{_fwd.1} parent=55 // pred_fallthru
          _
      $region56: #{_fwd.1} parent=5 // pred_fallthru
        _
      %p405 = scmp.le.s32.totalorder 1, %s26
      %p406 = scmp.lt.s32.totalorder %s26, 3
      %p407 = pnand %p405, %p406
      %p408 = pneg %p407
      // Predicated region
      $region61: #{_fwd.1} parent=5 // pred_check
        _
      $region62: #{_fwd.1} parent=5 // pred_check_branch
        %410 = sbr.rel (%p407) target = $region64
      $region63: #{_fwd.1} parent=5 // pred_region
        %s411 = ssub.s32 %s26, 1
        %s412 = sand.u32 %s39, 1
        %s413 = scalar_lea.sflag [#allocation3], %s412
        %s414 = sand.u32 %s39, 1
        %s415 = smul.addr %s414, 8
        %s416 = scalar_lea.vmem [#allocation2], %s415
        // Predicated region
        $region65: #{_fwd.1} parent=63 // pred_check
          %p417 = pneg %p52
        $region66: #{_fwd.1} parent=63 // pred_check_branch
          %419 = sbr.rel (%p417) target = $region68
        $region67: #{_fwd.1} parent=63 // pred_region
          %420 = dma.done %s413, 128
        $region68: #{_fwd.1} parent=63 // pred_fallthru
          _
        // Predicated region
        $region69: #{_fwd.1} parent=63 // pred_check
          %p421 = pneg %p73
        $region70: #{_fwd.1} parent=63 // pred_check_branch
          %423 = sbr.rel (%p421) target = $region72
        $region71: #{_fwd.1} parent=63 // pred_region
          %424 = dma.done [#allocation6], 256
        $region72: #{_fwd.1} parent=63 // pred_fallthru
          _
        // Predicated region
        $region73: #{_fwd.1} parent=63 // pred_check
          %p425 = pneg %p115
        $region74: #{_fwd.1} parent=63 // pred_check_branch
          %427 = sbr.rel (%p425) target = $region76
        $region75: #{_fwd.1} parent=63 // pred_region
          %428 = dma.done [#allocation6], 1024
        $region76: #{_fwd.1} parent=63 // pred_fallthru
          _
        // Predicated region
        $region77: #{_fwd.1} parent=63 // pred_check
          %p429 = pneg %p157
        $region78: #{_fwd.1} parent=63 // pred_check_branch
          %431 = sbr.rel (%p429) target = $region80
        $region79: #{_fwd.1} parent=63 // pred_region
          %432 = dma.done [#allocation9], 1024
        $region80: #{_fwd.1} parent=63 // pred_fallthru
          _
        // Predicated region
        $region81: #{_fwd.1} parent=63 // pred_check
          %p433 = pneg %p199
        $region82: #{_fwd.1} parent=63 // pred_check_branch
          %435 = sbr.rel (%p433) target = $region84
        $region83: #{_fwd.1} parent=63 // pred_region
          %436 = dma.done [#allocation9], 1024
        $region84: #{_fwd.1} parent=63 // pred_fallthru
          _
        // Predicated region
        $region85: #{_fwd.1} parent=63 // pred_check
          %p437 = pneg %p241
        $region86: #{_fwd.1} parent=63 // pred_check_branch
          %439 = sbr.rel (%p437) target = $region88
        $region87: #{_fwd.1} parent=63 // pred_region
          %440 = dma.done [#allocation12], 1024
        $region88: #{_fwd.1} parent=63 // pred_fallthru
          _
        %s441 = sand.u32 %s39, 1
        %s442 = scalar_lea.sflag [#allocation3], %s441
        %s443 = sand.u32 %s39, 1
        %s444 = smul.addr %s443, 8
        %s445 = scalar_lea.vmem [#allocation2], %s444
        %p446 = pneg %p52
        %p447 = pneg %p49
        %p448 = pneg %p73
        %p449 = pneg %p70
        %p450 = pneg %p94
        %p451 = pneg %p91
        %p452 = pneg %p115
        %p453 = pneg %p112
        %p454 = pneg %p136
        %p455 = pneg %p133
        %p456 = pneg %p157
        %p457 = pneg %p154
        %p458 = pneg %p178
        %p459 = pneg %p175
        %p460 = pneg %p199
        %p461 = pneg %p196
        %p462 = pneg %p220
        %p463 = pneg %p217
        %p464 = pneg %p241
        %p465 = pneg %p238
        %p466 = pneg %p262
        %p467 = pneg %p259
        %p468 = pneg %p288
        %p469 = pneg %p285
        %s470 = sand.u32 %s275, 1
        %s471 = scalar_lea.sflag [#allocation4], %s470
        %s472 = sand.u32 %s275, 1
        %s473 = smul.addr %s472, 8
        %s474 = scalar_lea.vmem [#allocation13], %s473
        %v476 = vld [vmem:[#allocation5] sm:$0xf]
        %v477 = vld [vmem:[#allocation5 + $0x4] sm:$0xf]
        %v478 = vld [vmem:[#allocation5 + $0x8] sm:$0xf]
        %v479 = vld [vmem:[#allocation5 + $0xc] sm:$0xf]
        %v480 = vld [vmem:[%s2] sm:$0x1]
        %v481 = vld [vmem:[#allocation7] sm:$0xf]
        %v482 = vld [vmem:[#allocation7 + $0x4] sm:$0xf]
        %v483 = vld [vmem:[#allocation7 + $0x8] sm:$0xf]
        %v484 = vld [vmem:[#allocation7 + $0xc] sm:$0xf]
        %v485 = vld [vmem:[#allocation7 + $0x10] sm:$0xf]
        %v486 = vld [vmem:[#allocation7 + $0x14] sm:$0xf]
        %v487 = vld [vmem:[#allocation7 + $0x18] sm:$0xf]
        %v488 = vld [vmem:[#allocation7 + $0x1c] sm:$0xf]
        %v489 = vld [vmem:[#allocation7 + $0x20] sm:$0xf]
        %v490 = vld [vmem:[#allocation7 + $0x24] sm:$0xf]
        %v491 = vld [vmem:[#allocation7 + $0x28] sm:$0xf]
        %v492 = vld [vmem:[#allocation7 + $0x2c] sm:$0xf]
        %v493 = vld [vmem:[#allocation7 + $0x30] sm:$0xf]
        %v494 = vld [vmem:[#allocation7 + $0x34] sm:$0xf]
        %v495 = vld [vmem:[#allocation7 + $0x38] sm:$0xf]
        %v496 = vld [vmem:[#allocation7 + $0x3c] sm:$0xf]
        %v497 = vld [vmem:[%s4] sm:$0x1]
        %v498 = vld [vmem:[#allocation8] sm:$0xf]
        %v499 = vld [vmem:[#allocation8 + $0x4] sm:$0xf]
        %v500 = vld [vmem:[#allocation8 + $0x8] sm:$0xf]
        %v501 = vld [vmem:[#allocation8 + $0xc] sm:$0xf]
        %v502 = vld [vmem:[#allocation8 + $0x10] sm:$0xf]
        %v503 = vld [vmem:[#allocation8 + $0x14] sm:$0xf]
        %v504 = vld [vmem:[#allocation8 + $0x18] sm:$0xf]
        %v505 = vld [vmem:[#allocation8 + $0x1c] sm:$0xf]
        %v506 = vld [vmem:[#allocation8 + $0x20] sm:$0xf]
        %v507 = vld [vmem:[#allocation8 + $0x24] sm:$0xf]
        %v508 = vld [vmem:[#allocation8 + $0x28] sm:$0xf]
        %v509 = vld [vmem:[#allocation8 + $0x2c] sm:$0xf]
        %v510 = vld [vmem:[#allocation8 + $0x30] sm:$0xf]
        %v511 = vld [vmem:[#allocation8 + $0x34] sm:$0xf]
        %v512 = vld [vmem:[#allocation8 + $0x38] sm:$0xf]
        %v513 = vld [vmem:[#allocation8 + $0x3c] sm:$0xf]
        %v514 = vld [vmem:[%s6] sm:$0x1]
        %v515 = vld [vmem:[#allocation10] sm:$0xf]
        %v516 = vld [vmem:[#allocation10 + $0x4] sm:$0xf]
        %v517 = vld [vmem:[#allocation10 + $0x8] sm:$0xf]
        %v518 = vld [vmem:[#allocation10 + $0xc] sm:$0xf]
        %v519 = vld [vmem:[#allocation10 + $0x10] sm:$0xf]
        %v520 = vld [vmem:[#allocation10 + $0x14] sm:$0xf]
        %v521 = vld [vmem:[#allocation10 + $0x18] sm:$0xf]
        %v522 = vld [vmem:[#allocation10 + $0x1c] sm:$0xf]
        %v523 = vld [vmem:[#allocation10 + $0x20] sm:$0xf]
        %v524 = vld [vmem:[#allocation10 + $0x24] sm:$0xf]
        %v525 = vld [vmem:[#allocation10 + $0x28] sm:$0xf]
        %v526 = vld [vmem:[#allocation10 + $0x2c] sm:$0xf]
        %v527 = vld [vmem:[#allocation10 + $0x30] sm:$0xf]
        %v528 = vld [vmem:[#allocation10 + $0x34] sm:$0xf]
        %v529 = vld [vmem:[#allocation10 + $0x38] sm:$0xf]
        %v530 = vld [vmem:[#allocation10 + $0x3c] sm:$0xf]
        %v531 = vld [vmem:[%s8] sm:$0x1]
        %v532 = vld [vmem:[#allocation11] sm:$0xf]
        %v533 = vld [vmem:[#allocation11 + $0x4] sm:$0xf]
        %v534 = vld [vmem:[#allocation11 + $0x8] sm:$0xf]
        %v535 = vld [vmem:[#allocation11 + $0xc] sm:$0xf]
        %v536 = vld [vmem:[#allocation11 + $0x10] sm:$0xf]
        %v537 = vld [vmem:[#allocation11 + $0x14] sm:$0xf]
        %v538 = vld [vmem:[#allocation11 + $0x18] sm:$0xf]
        %v539 = vld [vmem:[#allocation11 + $0x1c] sm:$0xf]
        %v540 = vld [vmem:[#allocation11 + $0x20] sm:$0xf]
        %v541 = vld [vmem:[#allocation11 + $0x24] sm:$0xf]
        %v542 = vld [vmem:[#allocation11 + $0x28] sm:$0xf]
        %v543 = vld [vmem:[#allocation11 + $0x2c] sm:$0xf]
        %v544 = vld [vmem:[#allocation11 + $0x30] sm:$0xf]
        %v545 = vld [vmem:[#allocation11 + $0x34] sm:$0xf]
        %v546 = vld [vmem:[#allocation11 + $0x38] sm:$0xf]
        %v547 = vld [vmem:[#allocation11 + $0x3c] sm:$0xf]
        %v548 = vld [vmem:[%s10] sm:$0x1]
        %v549 = vld [vmem:[%s416] sm:$0xff]
        %v550 = vpack.c.bf16 %v549, %v549
        %v552 = vlaneseq
        %v553 = vshrl.u32 %v552, 7
        %v554 = vsub.s32 0, %v553
        %v555 = vrot.slane %v480, %v554
        %v561 = vunpack.c.l.b16 %v476
        %v562 = vunpack.c.l.b16 %v477
        %v563 = vunpack.c.l.b16 %v478
        %v564 = vunpack.c.l.b16 %v479
        %v565 = vpack.c.b16 %v562, %v561
        %v566 = vpack.c.b16 %v564, %v563
        %vm569 = vcmask 261120
        %v571 = vsel %vm569, %v550, 0
        %573 = vmatprep.subr.bf16.mxu0 0
        %574 = vmatpush1.bf16.msra.mxu0 %v565
        %575 = vmatprep.subr.bf16.mxu0 0
        %576 = vmatpush1.bf16.msra.mxu0 %v566
        %577 = vmatprep.subr.bf16.mxu0 0
        %578 = vmatpush1.bf16.msra.mxu0 0
        %579 = vmatprep.subr.bf16.mxu0 0
        %580 = vmatpush1.bf16.msra.mxu0 0
        %581 = vmatprep.subr.bf16.mxu0 0
        %582 = vmatpush1.bf16.msra.mxu0 0
        %583 = vmatprep.subr.bf16.mxu0 0
        %584 = vmatpush1.bf16.msra.mxu0 0
        %585 = vmatprep.subr.bf16.mxu0 0
        %586 = vmatpush1.bf16.msra.mxu0 0
        %587 = vmatprep.subr.bf16.mxu0 0
        %588 = vmatpush1.bf16.msra.mxu0 0
        %589 = vmatprep.subr.bf16.mxu0 0
        %590 = vmatpush1.bf16.msra.mxu0 0
        %591 = vmatprep.subr.bf16.mxu0 0
        %592 = vmatpush1.bf16.msra.mxu0 0
        %593 = vmatprep.subr.bf16.mxu0 0
        %594 = vmatpush1.bf16.msra.mxu0 0
        %595 = vmatprep.subr.bf16.mxu0 0
        %596 = vmatpush1.bf16.msra.mxu0 0
        %597 = vmatprep.subr.bf16.mxu0 0
        %598 = vmatpush1.bf16.msra.mxu0 0
        %599 = vmatprep.subr.bf16.mxu0 0
        %600 = vmatpush1.bf16.msra.mxu0 0
        %601 = vmatprep.subr.bf16.mxu0 0
        %602 = vmatpush1.bf16.msra.mxu0 0
        %603 = vmatprep.subr.bf16.mxu0 0
        %604 = vmatpush1.bf16.msra.mxu0 0
        %605 = vmatprep.mubr.bf16.mxu0 0
        %606 = vmatmul.mubr.bf16.gmra.mrb[0].mxu0 %v571
        %v607 = vpop.f32.mrb[0].mxu0
        %v608 = vadd.f32 %v555, %v607
        %v609 = vpop.f32.mrb[0].mxu0
        %v610 = vpop.f32.mrb[0].mxu0
        %v611 = vpop.f32.mrb[0].mxu0
        %612 = vdwg.mxu0
        %v613 = vtanh.pop %v608
        %v614 = vpack.c.bf16 %v613, %v613
        %v616 = vlaneseq
        %v617 = vshrl.u32 %v616, 7
        %v618 = vsub.s32 0, %v617
        %v619 = vrot.slane %v497, %v618
        %v637 = vunpack.c.l.b16 %v481
        %v638 = vunpack.c.l.b16 %v482
        %v639 = vunpack.c.l.b16 %v483
        %v640 = vunpack.c.l.b16 %v484
        %v641 = vunpack.c.l.b16 %v485
        %v642 = vunpack.c.l.b16 %v486
        %v643 = vunpack.c.l.b16 %v487
        %v644 = vunpack.c.l.b16 %v488
        %v645 = vunpack.c.l.b16 %v489
        %v646 = vunpack.c.l.b16 %v490
        %v647 = vunpack.c.l.b16 %v491
        %v648 = vunpack.c.l.b16 %v492
        %v649 = vunpack.c.l.b16 %v493
        %v650 = vunpack.c.l.b16 %v494
        %v651 = vunpack.c.l.b16 %v495
        %v652 = vunpack.c.l.b16 %v496
        %v653 = vpack.c.b16 %v638, %v637
        %v654 = vpack.c.b16 %v640, %v639
        %v655 = vpack.c.b16 %v642, %v641
        %v656 = vpack.c.b16 %v644, %v643
        %v657 = vpack.c.b16 %v646, %v645
        %v658 = vpack.c.b16 %v648, %v647
        %v659 = vpack.c.b16 %v650, %v649
        %v660 = vpack.c.b16 %v652, %v651
        %669 = vmatprep.subr.bf16.mxu0 0
        %670 = vmatpush1.bf16.msra.mxu0 %v653
        %671 = vmatprep.subr.bf16.mxu0 0
        %672 = vmatpush1.bf16.msra.mxu0 %v654
        %673 = vmatprep.subr.bf16.mxu0 0
        %674 = vmatpush1.bf16.msra.mxu0 %v655
        %675 = vmatprep.subr.bf16.mxu0 0
        %676 = vmatpush1.bf16.msra.mxu0 %v656
        %677 = vmatprep.subr.bf16.mxu0 0
        %678 = vmatpush1.bf16.msra.mxu0 %v657
        %679 = vmatprep.subr.bf16.mxu0 0
        %680 = vmatpush1.bf16.msra.mxu0 %v658
        %681 = vmatprep.subr.bf16.mxu0 0
        %682 = vmatpush1.bf16.msra.mxu0 %v659
        %683 = vmatprep.subr.bf16.mxu0 0
        %684 = vmatpush1.bf16.msra.mxu0 %v660
        %685 = vmatprep.subr.bf16.mxu0 0
        %686 = vmatpush1.bf16.msra.mxu0 0
        %687 = vmatprep.subr.bf16.mxu0 0
        %688 = vmatpush1.bf16.msra.mxu0 0
        %689 = vmatprep.subr.bf16.mxu0 0
        %690 = vmatpush1.bf16.msra.mxu0 0
        %691 = vmatprep.subr.bf16.mxu0 0
        %692 = vmatpush1.bf16.msra.mxu0 0
        %693 = vmatprep.subr.bf16.mxu0 0
        %694 = vmatpush1.bf16.msra.mxu0 0
        %695 = vmatprep.subr.bf16.mxu0 0
        %696 = vmatpush1.bf16.msra.mxu0 0
        %697 = vmatprep.subr.bf16.mxu0 0
        %698 = vmatpush1.bf16.msra.mxu0 0
        %699 = vmatprep.subr.bf16.mxu0 0
        %700 = vmatpush1.bf16.msra.mxu0 0
        %701 = vmatprep.mubr.bf16.mxu0 0
        %702 = vmatmul.mubr.bf16.gmra.mrb[0].mxu0 %v614
        %v703 = vpop.f32.mrb[0].mxu0
        %v704 = vadd.f32 %v619, %v703
        %v705 = vpop.f32.mrb[0].mxu0
        %v706 = vpop.f32.mrb[0].mxu0
        %v707 = vpop.f32.mrb[0].mxu0
        %708 = vdwg.mxu0
        %v709 = vtanh.pop %v704
        %v710 = vpack.c.bf16 %v709, %v709
        %v712 = vlaneseq
        %v713 = vshrl.u32 %v712, 7
        %v714 = vsub.s32 0, %v713
        %v715 = vrot.slane %v514, %v714
        %v733 = vunpack.c.l.b16 %v498
        %v734 = vunpack.c.l.b16 %v499
        %v735 = vunpack.c.l.b16 %v500
        %v736 = vunpack.c.l.b16 %v501
        %v737 = vunpack.c.l.b16 %v502
        %v738 = vunpack.c.l.b16 %v503
        %v739 = vunpack.c.l.b16 %v504
        %v740 = vunpack.c.l.b16 %v505
        %v741 = vunpack.c.l.b16 %v506
        %v742 = vunpack.c.l.b16 %v507
        %v743 = vunpack.c.l.b16 %v508
        %v744 = vunpack.c.l.b16 %v509
        %v745 = vunpack.c.l.b16 %v510
        %v746 = vunpack.c.l.b16 %v511
        %v747 = vunpack.c.l.b16 %v512
        %v748 = vunpack.c.l.b16 %v513
        %v749 = vpack.c.b16 %v734, %v733
        %v750 = vpack.c.b16 %v736, %v735
        %v751 = vpack.c.b16 %v738, %v737
        %v752 = vpack.c.b16 %v740, %v739
        %v753 = vpack.c.b16 %v742, %v741
        %v754 = vpack.c.b16 %v744, %v743
        %v755 = vpack.c.b16 %v746, %v745
        %v756 = vpack.c.b16 %v748, %v747
        %765 = vmatprep.subr.bf16.mxu0 0
        %766 = vmatpush1.bf16.msra.mxu0 %v749
        %767 = vmatprep.subr.bf16.mxu0 0
        %768 = vmatpush1.bf16.msra.mxu0 %v750
        %769 = vmatprep.subr.bf16.mxu0 0
        %770 = vmatpush1.bf16.msra.mxu0 %v751
        %771 = vmatprep.subr.bf16.mxu0 0
        %772 = vmatpush1.bf16.msra.mxu0 %v752
        %773 = vmatprep.subr.bf16.mxu0 0
        %774 = vmatpush1.bf16.msra.mxu0 %v753
        %775 = vmatprep.subr.bf16.mxu0 0
        %776 = vmatpush1.bf16.msra.mxu0 %v754
        %777 = vmatprep.subr.bf16.mxu0 0
        %778 = vmatpush1.bf16.msra.mxu0 %v755
        %779 = vmatprep.subr.bf16.mxu0 0
        %780 = vmatpush1.bf16.msra.mxu0 %v756
        %781 = vmatprep.subr.bf16.mxu0 0
        %782 = vmatpush1.bf16.msra.mxu0 0
        %783 = vmatprep.subr.bf16.mxu0 0
        %784 = vmatpush1.bf16.msra.mxu0 0
        %785 = vmatprep.subr.bf16.mxu0 0
        %786 = vmatpush1.bf16.msra.mxu0 0
        %787 = vmatprep.subr.bf16.mxu0 0
        %788 = vmatpush1.bf16.msra.mxu0 0
        %789 = vmatprep.subr.bf16.mxu0 0
        %790 = vmatpush1.bf16.msra.mxu0 0
        %791 = vmatprep.subr.bf16.mxu0 0
        %792 = vmatpush1.bf16.msra.mxu0 0
        %793 = vmatprep.subr.bf16.mxu0 0
        %794 = vmatpush1.bf16.msra.mxu0 0
        %795 = vmatprep.subr.bf16.mxu0 0
        %796 = vmatpush1.bf16.msra.mxu0 0
        %797 = vmatprep.mubr.bf16.mxu0 0
        %798 = vmatmul.mubr.bf16.gmra.mrb[0].mxu0 %v710
        %v799 = vpop.f32.mrb[0].mxu0
        %v800 = vadd.f32 %v715, %v799
        %v801 = vpop.f32.mrb[0].mxu0
        %v802 = vpop.f32.mrb[0].mxu0
        %v803 = vpop.f32.mrb[0].mxu0
        %804 = vdwg.mxu0
        %v805 = vtanh.pop %v800
        %v806 = vpack.c.bf16 %v805, %v805
        %v808 = vlaneseq
        %v809 = vshrl.u32 %v808, 7
        %v810 = vsub.s32 0, %v809
        %v811 = vrot.slane %v531, %v810
        %v829 = vunpack.c.l.b16 %v515
        %v830 = vunpack.c.l.b16 %v516
        %v831 = vunpack.c.l.b16 %v517
        %v832 = vunpack.c.l.b16 %v518
        %v833 = vunpack.c.l.b16 %v519
        %v834 = vunpack.c.l.b16 %v520
        %v835 = vunpack.c.l.b16 %v521
        %v836 = vunpack.c.l.b16 %v522
        %v837 = vunpack.c.l.b16 %v523
        %v838 = vunpack.c.l.b16 %v524
        %v839 = vunpack.c.l.b16 %v525
        %v840 = vunpack.c.l.b16 %v526
        %v841 = vunpack.c.l.b16 %v527
        %v842 = vunpack.c.l.b16 %v528
        %v843 = vunpack.c.l.b16 %v529
        %v844 = vunpack.c.l.b16 %v530
        %v845 = vpack.c.b16 %v830, %v829
        %v846 = vpack.c.b16 %v832, %v831
        %v847 = vpack.c.b16 %v834, %v833
        %v848 = vpack.c.b16 %v836, %v835
        %v849 = vpack.c.b16 %v838, %v837
        %v850 = vpack.c.b16 %v840, %v839
        %v851 = vpack.c.b16 %v842, %v841
        %v852 = vpack.c.b16 %v844, %v843
        %861 = vmatprep.subr.bf16.mxu0 0
        %862 = vmatpush1.bf16.msra.mxu0 %v845
        %863 = vmatprep.subr.bf16.mxu0 0
        %864 = vmatpush1.bf16.msra.mxu0 %v846
        %865 = vmatprep.subr.bf16.mxu0 0
        %866 = vmatpush1.bf16.msra.mxu0 %v847
        %867 = vmatprep.subr.bf16.mxu0 0
        %868 = vmatpush1.bf16.msra.mxu0 %v848
        %869 = vmatprep.subr.bf16.mxu0 0
        %870 = vmatpush1.bf16.msra.mxu0 %v849
        %871 = vmatprep.subr.bf16.mxu0 0
        %872 = vmatpush1.bf16.msra.mxu0 %v850
        %873 = vmatprep.subr.bf16.mxu0 0
        %874 = vmatpush1.bf16.msra.mxu0 %v851
        %875 = vmatprep.subr.bf16.mxu0 0
        %876 = vmatpush1.bf16.msra.mxu0 %v852
        %877 = vmatprep.subr.bf16.mxu0 0
        %878 = vmatpush1.bf16.msra.mxu0 0
        %879 = vmatprep.subr.bf16.mxu0 0
        %880 = vmatpush1.bf16.msra.mxu0 0
        %881 = vmatprep.subr.bf16.mxu0 0
        %882 = vmatpush1.bf16.msra.mxu0 0
        %883 = vmatprep.subr.bf16.mxu0 0
        %884 = vmatpush1.bf16.msra.mxu0 0
        %885 = vmatprep.subr.bf16.mxu0 0
        %886 = vmatpush1.bf16.msra.mxu0 0
        %887 = vmatprep.subr.bf16.mxu0 0
        %888 = vmatpush1.bf16.msra.mxu0 0
        %889 = vmatprep.subr.bf16.mxu0 0
        %890 = vmatpush1.bf16.msra.mxu0 0
        %891 = vmatprep.subr.bf16.mxu0 0
        %892 = vmatpush1.bf16.msra.mxu0 0
        %893 = vmatprep.mubr.bf16.mxu0 0
        %894 = vmatmul.mubr.bf16.gmra.mrb[0].mxu0 %v806
        %v895 = vpop.f32.mrb[0].mxu0
        %v896 = vadd.f32 %v811, %v895
        %v897 = vpop.f32.mrb[0].mxu0
        %v898 = vpop.f32.mrb[0].mxu0
        %v899 = vpop.f32.mrb[0].mxu0
        %900 = vdwg.mxu0
        %v901 = vtanh.pop %v896
        %v902 = vpack.c.bf16 %v901, %v901
        %v904 = vlaneseq
        %v905 = vshrl.u32 %v904, 7
        %v906 = vsub.s32 0, %v905
        %v907 = vrot.slane %v548, %v906
        %v925 = vunpack.c.l.b16 %v532
        %v926 = vunpack.c.l.b16 %v533
        %v927 = vunpack.c.l.b16 %v534
        %v928 = vunpack.c.l.b16 %v535
        %v929 = vunpack.c.l.b16 %v536
        %v930 = vunpack.c.l.b16 %v537
        %v931 = vunpack.c.l.b16 %v538
        %v932 = vunpack.c.l.b16 %v539
        %v933 = vunpack.c.l.b16 %v540
        %v934 = vunpack.c.l.b16 %v541
        %v935 = vunpack.c.l.b16 %v542
        %v936 = vunpack.c.l.b16 %v543
        %v937 = vunpack.c.l.b16 %v544
        %v938 = vunpack.c.l.b16 %v545
        %v939 = vunpack.c.l.b16 %v546
        %v940 = vunpack.c.l.b16 %v547
        %v941 = vpack.c.b16 %v926, %v925
        %v942 = vpack.c.b16 %v928, %v927
        %v943 = vpack.c.b16 %v930, %v929
        %v944 = vpack.c.b16 %v932, %v931
        %v945 = vpack.c.b16 %v934, %v933
        %v946 = vpack.c.b16 %v936, %v935
        %v947 = vpack.c.b16 %v938, %v937
        %v948 = vpack.c.b16 %v940, %v939
        %957 = vmatprep.subr.bf16.mxu0 0
        %958 = vmatpush1.bf16.msra.mxu0 %v941
        %959 = vmatprep.subr.bf16.mxu0 0
        %960 = vmatpush1.bf16.msra.mxu0 %v942
        %961 = vmatprep.subr.bf16.mxu0 0
        %962 = vmatpush1.bf16.msra.mxu0 %v943
        %963 = vmatprep.subr.bf16.mxu0 0
        %964 = vmatpush1.bf16.msra.mxu0 %v944
        %965 = vmatprep.subr.bf16.mxu0 0
        %966 = vmatpush1.bf16.msra.mxu0 %v945
        %967 = vmatprep.subr.bf16.mxu0 0
        %968 = vmatpush1.bf16.msra.mxu0 %v946
        %969 = vmatprep.subr.bf16.mxu0 0
        %970 = vmatpush1.bf16.msra.mxu0 %v947
        %971 = vmatprep.subr.bf16.mxu0 0
        %972 = vmatpush1.bf16.msra.mxu0 %v948
        %973 = vmatprep.subr.bf16.mxu0 0
        %974 = vmatpush1.bf16.msra.mxu0 0
        %975 = vmatprep.subr.bf16.mxu0 0
        %976 = vmatpush1.bf16.msra.mxu0 0
        %977 = vmatprep.subr.bf16.mxu0 0
        %978 = vmatpush1.bf16.msra.mxu0 0
        %979 = vmatprep.subr.bf16.mxu0 0
        %980 = vmatpush1.bf16.msra.mxu0 0
        %981 = vmatprep.subr.bf16.mxu0 0
        %982 = vmatpush1.bf16.msra.mxu0 0
        %983 = vmatprep.subr.bf16.mxu0 0
        %984 = vmatpush1.bf16.msra.mxu0 0
        %985 = vmatprep.subr.bf16.mxu0 0
        %986 = vmatpush1.bf16.msra.mxu0 0
        %987 = vmatprep.subr.bf16.mxu0 0
        %988 = vmatpush1.bf16.msra.mxu0 0
        %989 = vmatprep.mubr.bf16.mxu0 0
        %990 = vmatmul.mubr.bf16.gmra.mrb[0].mxu0 %v902
        %v991 = vpop.f32.mrb[0].mxu0
        %v992 = vadd.f32 %v907, %v991
        %v993 = vpop.f32.mrb[0].mxu0
        %v994 = vpop.f32.mrb[0].mxu0
        %v995 = vpop.f32.mrb[0].mxu0
        %996 = vdwg.mxu0
        %997 = vst [vmem:[%s474] sm:$0xff] %v992
        %s998 = sand.u32 %s275, 1
        %s999 = scalar_lea.sflag [#allocation4], %s998
        %s1000 = sand.u32 %s275, 1
        %s1001 = smul.addr %s1000, 8
        %s1002 = scalar_lea.vmem [#allocation13], %s1001
        // Predicated region
        $region89: #{_fwd.1} parent=63 // pred_check
          %p1003 = pneg %p285
        $region90: #{_fwd.1} parent=63 // pred_check_branch
          %1005 = sbr.rel (%p1003) target = $region92
        $region91: #{_fwd.1} parent=63 // pred_region
          %s1007 = ssub.s32 128, 128
          %1008 = vsyncadd %s999, %s1007
          %s1009 = smul.addr %s31, 128
          %s1010 = scalar_lea.hbm %s11, %s1009
          %s1012 = sshll.u32 %s1002, 4
          %s1013 = int_to_ptr.vmem [resolvable:$true] %s1012
          %1015 = dma.vmem_to_hbm [thread:$0]  %s1013, 128, %s1010, %s999
        $region92: #{_fwd.1} parent=63 // pred_fallthru
          _
      $region64: #{_fwd.1} parent=5 // pred_fallthru
        _
      %p1016 = scmp.le.s32.totalorder 2, %s26
      // Predicated region
      $region93: #{_fwd.1} parent=5 // pred_check
        %p1017 = pneg %p1016
      $region94: #{_fwd.1} parent=5 // pred_check_branch
        %1019 = sbr.rel (%p1017) target = $region96
      $region95: #{_fwd.1} parent=5 // pred_region
        %s1020 = ssub.s32 %s26, 2
        // Predicated region
        $region97: #{_fwd.1} parent=95 // pred_check
          %p1021 = pneg %p291
        $region98: #{_fwd.1} parent=95 // pred_check_branch
          %1023 = sbr.rel (%p1021) target = $region100
        $region99: #{_fwd.1} parent=95 // pred_region
          %s1024 = sand.u32 %s276, 1
          %s1025 = scalar_lea.sflag [#allocation4], %s1024
          %s1026 = sand.u32 %s276, 1
          %s1027 = smul.addr %s1026, 8
          %s1028 = scalar_lea.vmem [#allocation13], %s1027
          %1029 = dma.done %s1025, 128
        $region100: #{_fwd.1} parent=95 // pred_fallthru
          _
      $region96: #{_fwd.1} parent=5 // pred_fallthru
        _
    $region6: #{_fwd.1} parent=1 // loop_footer
      %s30 = sadd.s32 1, %s26
    $region7: #{_fwd.1} parent=1 // loop_footer_branch
      %25 = sbr.rel target = $region3
    $region8: #{_fwd.1} parent=1 // loop_exit
      _
    %1030 = vsyncpa [#allocation3], 1
    %s1031 = scalar_lea.sflag [#allocation3], 1
    %1032 = vsyncpa %s1031, 1
    %1033 = vsyncpa [#allocation6], 1
    %1034 = vsyncpa [#allocation9], 1
    %1035 = vsyncpa [#allocation12], 1
    %1036 = vsyncpa [#allocation4], 1
    %s1037 = scalar_lea.sflag [#allocation4], 1
    %1038 = vsyncpa %s1037, 1

</llo_original>
